<compile_context>
chip_gen: v6e
topology: v6e:2x2x1
jax: 0.10.0
libtpu: 0.0.40
codegen_flags: <defaults>
</compile_context>

<pallas_src>
import jax
import jax.numpy as jnp
from jax.experimental import pallas as pl
from jax.experimental.pallas import tpu as pltpu


def _linear_kernel(x_ref, w_ref, b_ref, o_ref):
    # x_ref: (bm, tk) f32  -- batch tile x K-tile of the flattened image
    # w_ref: (L,  tk) f32  -- PyTorch-layout weight tile (labels x K-tile)
    # b_ref: (1,  L ) f32
    # o_ref: (bm, L ) f32  -- stays resident in VMEM across the K axis
    k = pl.program_id(1)

    @pl.when(k == 0)
    def _init():
        o_ref[...] = jnp.broadcast_to(b_ref[...], o_ref.shape)

    # x @ W^T on the MXU: contract dim 1 of x with dim 1 of w, f32 accumulate.
    o_ref[...] += jax.lax.dot_general(
        x_ref[...],
        w_ref[...],
        dimension_numbers=(((1,), (1,)), ((), ())),
        preferred_element_type=jnp.float32,
    )


def _pick_k_tile(d):
    # Largest lane-aligned tile (<= 2048) that divides D with >= 2 steps so
    # the reduction axis actually pipelines; otherwise take all of D as one
    # block (a full-array block bypasses the (8,128) divisibility rule).
    if d > 512:
        for cand in (2048, 1024, 512):
            if d % cand == 0 and d // cand >= 2:
                return cand
    return d


@jax.jit
def logistic_regression_forward(xb, weight, bias):
    """Equivalent of LogisticRegression.forward.

    xb:     (B, C, H, W) any float dtype (NCHW, like PyTorch)
    weight: (L, D) float   (nn.Linear weight, D = C*H*W)
    bias:   (L,)   float
    returns (B, L) float32
    """
    B = xb.shape[0]
    L, D = weight.shape

    # Glue matching the module: xb.view(B, -1).type(torch.float32).
    x = xb.reshape(B, -1).astype(jnp.float32)
    assert x.shape[1] == D

    w = weight.astype(jnp.float32)              # native (L, D), no transpose/copy
    b2 = bias.astype(jnp.float32).reshape(1, L)

    tk = _pick_k_tile(D)
    num_k = D // tk                              # _pick_k_tile returns a divisor of D

    bm = B if B <= 256 else 256                  # batch tile (full array when small)
    num_b = (B + bm - 1) // bm

    out = pl.pallas_call(
        _linear_kernel,
        out_shape=jax.ShapeDtypeStruct((B, L), jnp.float32),
        grid=(num_b, num_k),
        in_specs=[
            pl.BlockSpec((bm, tk), lambda i, k: (i, k)),   # x tile
            pl.BlockSpec((L, tk), lambda i, k: (0, k)),    # weight tile (L, tk)
            pl.BlockSpec((1, L), lambda i, k: (0, 0)),     # bias (constant)
        ],
        out_specs=pl.BlockSpec((bm, L), lambda i, k: (i, 0)),
        compiler_params=pltpu.CompilerParams(
            dimension_semantics=("parallel", "arbitrary"),
        ),
    )(x, w, b2)
    return out


if __name__ == "__main__":
    # Small shapes consistent with the module: images (B, C, H, W), 10 labels.
    B, C, H, W = 2, 4, 16, 16
    D = C * H * W          # image_size
    L = 10                 # labels

    key = jax.random.PRNGKey(0)
    kx, kw, kb = jax.random.split(key, 3)

    # Deterministic parameter init mimicking nn.Linear (uniform +/- 1/sqrt(D)).
    bound = 1.0 / jnp.sqrt(jnp.float32(D))
    weight = jax.random.uniform(kw, (L, D), jnp.float32, -bound, bound)
    bias = jax.random.uniform(kb, (L,), jnp.float32, -bound, bound)
    xb = jax.random.normal(kx, (B, C, H, W), jnp.float32)

    out = logistic_regression_forward(xb, weight, bias)
    jax.block_until_ready(out)

    # Sanity check against plain-JAX reference.
    ref = xb.reshape(B, -1).astype(jnp.float32) @ weight.T + bias
    assert out.shape == (B, L)
    assert jnp.allclose(out, ref, atol=1e-4, rtol=1e-4), float(
        jnp.max(jnp.abs(out - ref))
    )

    print("KERNEL_OK")
</pallas_src>

<mosaic_0001>
module attributes {stable_mosaic.version = 11 : i64} {
  func.func @_linear_kernel(%arg0: i32, %arg1: i32, %arg2: memref<2x512xf32, #tpu.memory_space<vmem>>, %arg3: memref<10x512xf32, #tpu.memory_space<vmem>>, %arg4: memref<1x10xf32, #tpu.memory_space<vmem>>, %arg5: memref<2x10xf32, #tpu.memory_space<vmem>>) attributes {dimension_semantics = [#tpu.dimension_semantics<parallel>, #tpu.dimension_semantics<arbitrary>], iteration_bounds = array<i64: 1, 2>, scalar_prefetch = 0 : i64, scratch_operands = 0 : i64, tpu.core_type = #tpu.core_type<tc>, window_params = [{transform_indices = @transform_0, window_bounds = array<i64: 2, 512>}, {transform_indices = @transform_1, window_bounds = array<i64: 10, 512>}, {pipeline_mode = #tpu.pipeline_mode<synchronous>, transform_indices = @transform_2, window_bounds = array<i64: 1, 10>}, {transform_indices = @transform_3, window_bounds = array<i64: 2, 10>}]} {
    %c0_i32 = arith.constant 0 : i32
    %0 = arith.cmpi eq, %arg1, %c0_i32 : i32
    %1 = arith.extui %0 : i1 to i32
    %c0_i32_0 = arith.constant 0 : i32
    %2 = arith.cmpi ne, %1, %c0_i32_0 : i32
    scf.if %2 {
      %c0_8 = arith.constant 0 : index
      %c0_9 = arith.constant 0 : index
      %9 = vector.load %arg4[%c0_8, %c0_9] : memref<1x10xf32, #tpu.memory_space<vmem>>, vector<1x10xf32>
      %10 = vector.shape_cast %9 : vector<1x10xf32> to vector<1x10xf32>
      %11 = vector.broadcast %10 : vector<1x10xf32> to vector<2x10xf32>
      %c0_10 = arith.constant 0 : index
      %c0_11 = arith.constant 0 : index
      %12 = vector.load %arg5[%c0_10, %c0_11] : memref<2x10xf32, #tpu.memory_space<vmem>>, vector<2x10xf32>
      tpu.vector_store %arg5[%c0_10, %c0_11], %11 {strides = array<i32>} : memref<2x10xf32, #tpu.memory_space<vmem>>, vector<2x10xf32>,
    } else {
    }
    %c0 = arith.constant 0 : index
    %c0_1 = arith.constant 0 : index
    %3 = vector.load %arg5[%c0, %c0_1] : memref<2x10xf32, #tpu.memory_space<vmem>>, vector<2x10xf32>
    %c0_2 = arith.constant 0 : index
    %c0_3 = arith.constant 0 : index
    %4 = vector.load %arg2[%c0_2, %c0_3] : memref<2x512xf32, #tpu.memory_space<vmem>>, vector<2x512xf32>
    %c0_4 = arith.constant 0 : index
    %c0_5 = arith.constant 0 : index
    %5 = vector.load %arg3[%c0_4, %c0_5] : memref<10x512xf32, #tpu.memory_space<vmem>>, vector<10x512xf32>
    %cst = arith.constant dense<0.000000e+00> : vector<2x10xf32>
    %6 = tpu.matmul %4, %5, %cst {dimension_numbers = #tpu.dot_dimension_numbers<[1], [1], [0], [0], [0, 0, 1, 0], [], []>} : vector<2x512xf32>, vector<10x512xf32>, vector<2x10xf32> -> vector<2x10xf32>
    %7 = arith.addf %3, %6 : vector<2x10xf32>
    %c0_6 = arith.constant 0 : index
    %c0_7 = arith.constant 0 : index
    %8 = vector.load %arg5[%c0_6, %c0_7] : memref<2x10xf32, #tpu.memory_space<vmem>>, vector<2x10xf32>
    tpu.vector_store %arg5[%c0_6, %c0_7], %7 {strides = array<i32>} : memref<2x10xf32, #tpu.memory_space<vmem>>, vector<2x10xf32>,
    return
  }
  func.func @transform_0(%arg0: i32, %arg1: i32) -> (i32, i32) {
    %c0_i32 = arith.constant 0 : i32
    return %arg0, %arg1 : i32, i32
  }
  func.func @transform_1(%arg0: i32, %arg1: i32) -> (i32, i32) {
    %c0_i32 = arith.constant 0 : i32
    %c0_i32_0 = arith.constant 0 : i32
    return %c0_i32, %arg1 : i32, i32
  }
  func.func @transform_2(%arg0: i32, %arg1: i32) -> (i32, i32) {
    %c0_i32 = arith.constant 0 : i32
    %c0_i32_0 = arith.constant 0 : i32
    %c0_i32_1 = arith.constant 0 : i32
    return %c0_i32, %c0_i32_0 : i32, i32
  }
  func.func @transform_3(%arg0: i32, %arg1: i32) -> (i32, i32) {
    %c0_i32 = arith.constant 0 : i32
    %c0_i32_0 = arith.constant 0 : i32
    return %arg0, %c0_i32 : i32, i32
  }
}

</mosaic_0001>

<llo_original>
// kernel: logistic_regression_forward.1
$region0: #{logistic_regression_forward.1}
  #allocation0 [shape = 'u32[]', space=smem, size = 0x4, offset = 0x4, fixed_abs, tag = 'smem constant byte address 0x4 - core index']
  #allocation1 [shape = 'u32[144,128]{1,0:T(1,128)}', space=vmem, size = 0x12000, scoped, tag = 'internal scratch']
  %s0 = inlined_call_operand.vmem [shape: f32[2,1024], index: 0, kind: input, shape index: {}]
  %s1 = inlined_call_operand.vmem [shape: f32[10,1024], index: 1, kind: input, shape index: {}]
  %s2 = inlined_call_operand.vmem [shape: f32[1,10], index: 2, kind: input, shape index: {}]
  %s3 = inlined_call_operand.hbm [shape: f32[2,10], index: 3, kind: output, shape index: {}]
  %s4 = sld [smem:[#allocation0]]
  $region72: #{logistic_regression_forward.1} parent=0
    _
  %s6 = ssub.s32 1, %s4
  %s7 = scalar_select 0, %s6, %s4
  $region1: #{logistic_regression_forward.1} parent=0
    #allocation2 [shape = 'u8[65536]{0}', space=vmem, size = 0x10000, scoped, tag = 'input window, operand 1']
    #allocation3 [shape = 'u8[1024]{0}', space=vmem, size = 0x400, scoped, tag = 'output window, operand 0, single buffered']
    #allocation4 [shape = 's32[2]{0}', space=sflag, size = 0x8, scoped, tag = 'scoped memory for logistic_regression_forward.1']
    %8 = vsyncpa [#allocation4], 0
    loop: start=0, step=1, limit=4
    $region2: #{logistic_regression_forward.1} parent=1 // loop_pre_header
      _
    $region3: #{logistic_regression_forward.1} parent=1 // loop_header
      %s10 = sphi 0, %s14
      %p11 = scmp.ge.s32.totalorder %s10, 4
      %s17 = sphi 0, %s29
      %s18 = sphi 0, %s25
      %s19 = sphi 0, %s17
      %s20 = sphi 0, %s18
      %s21 = sphi 0, %s19
      %s22 = sphi 0, %s20
      %s34 = sphi 0, %s36
      %s37 = sphi 0, %s34
      %s38 = sphi 0, %s37
      %s54 = sphi 0, %s38
      %s60 = sphi 0, %s62
      %s63 = sphi 0, %s60
      %s64 = sphi 0, %s63
      %s80 = sphi 0, %s64
      %s84 = sphi 0, %s84
      %s86 = sphi 0, %s84
      %s87 = sphi 0, %s86
      %s101 = sphi 0, %s87
      %s107 = sphi 0, %s109
      %s110 = sphi 0, %s107
      %s111 = sphi 0, %s110
      %s127 = sphi 0, %s111
    $region4: #{logistic_regression_forward.1} parent=1 // loop_header_branch
      %13 = sbr.rel (%p11) target = $region8
    $region5: #{logistic_regression_forward.1} parent=1 // loop_body
      %s15 = ssub.s32 %s10, 1
      %s16 = ssub.s32 %s10, 2
      %s23 = sadd.s32 1, %s18
      %p24 = scmp.ge.s32.totalorder %s23, 2
      %s25 = scalar_select %p24, 0, %s23
      %s26 = sadd.s32 1, %s17
      %s27 = scalar_select %p24, %s26, %s17
      %p28 = scmp.ge.s32.totalorder %s27, 1
      %s29 = scalar_select %p28, 0, %s27
      %s30 = ssub.s32 %s17, %s29
      %s31 = ssub.s32 %s18, %s25
      %s32 = sor.u32 %s30, %s31
      %p33 = scmp.eq.s32.totalorder %s32, 0
      %s35 = sadd.s32 %s34, 1
      %s36 = scalar_select %p33, %s34, %s35
      %p39 = pneg %p33
      %p40 = scmp.eq.s32.totalorder %s10, 1
      %p41 = por %p39, %p40
      %p42 = scmp.ne.s32.totalorder %s34, %s37
      %p43 = scmp.eq.s32.totalorder %s10, 0
      %p44 = por %p42, %p43
      %p45 = scmp.ne.s32.totalorder %s34, %s37
      %p46 = scmp.eq.s32.totalorder %s15, 1
      %p47 = por %p45, %p46
      %p48 = scmp.ne.s32.totalorder %s37, %s38
      %p49 = scmp.eq.s32.totalorder %s15, 0
      %p50 = por %p48, %p49
      %p51 = scmp.ne.s32.totalorder %s37, %s38
      %p52 = scmp.eq.s32.totalorder %s16, 1
      %p53 = por %p51, %p52
      %p55 = scmp.ne.s32.totalorder %s38, %s54
      %p56 = scmp.eq.s32.totalorder %s16, 0
      %p57 = por %p55, %p56
      %s58 = ssub.s32 %s18, %s25
      %p59 = scmp.eq.s32.totalorder %s58, 0
      %s61 = sadd.s32 %s60, 1
      %s62 = scalar_select %p59, %s60, %s61
      %p65 = pneg %p59
      %p66 = scmp.eq.s32.totalorder %s10, 1
      %p67 = por %p65, %p66
      %p68 = scmp.ne.s32.totalorder %s60, %s63
      %p69 = scmp.eq.s32.totalorder %s10, 0
      %p70 = por %p68, %p69
      %p71 = scmp.ne.s32.totalorder %s60, %s63
      %p72 = scmp.eq.s32.totalorder %s15, 1
      %p73 = por %p71, %p72
      %p74 = scmp.ne.s32.totalorder %s63, %s64
      %p75 = scmp.eq.s32.totalorder %s15, 0
      %p76 = por %p74, %p75
      %p77 = scmp.ne.s32.totalorder %s63, %s64
      %p78 = scmp.eq.s32.totalorder %s16, 1
      %p79 = por %p77, %p78
      %p81 = scmp.ne.s32.totalorder %s64, %s80
      %p82 = scmp.eq.s32.totalorder %s16, 0
      %p83 = por %p81, %p82
      %s85 = sadd.s32 %s84, 1
      %p88 = scmp.eq.s32.totalorder %s10, 1
      %p89 = scmp.ne.s32.totalorder %s84, %s86
      %p90 = scmp.eq.s32.totalorder %s10, 0
      %p91 = por %p89, %p90
      %p92 = scmp.ne.s32.totalorder %s84, %s86
      %p93 = scmp.eq.s32.totalorder %s15, 1
      %p94 = por %p92, %p93
      %p95 = scmp.ne.s32.totalorder %s86, %s87
      %p96 = scmp.eq.s32.totalorder %s15, 0
      %p97 = por %p95, %p96
      %p98 = scmp.ne.s32.totalorder %s86, %s87
      %p99 = scmp.eq.s32.totalorder %s16, 1
      %p100 = por %p98, %p99
      %p102 = scmp.ne.s32.totalorder %s87, %s101
      %p103 = scmp.eq.s32.totalorder %s16, 0
      %p104 = por %p102, %p103
      %s105 = ssub.s32 %s17, %s29
      %p106 = scmp.eq.s32.totalorder %s105, 0
      %s108 = sadd.s32 %s107, 1
      %s109 = scalar_select %p106, %s107, %s108
      %p112 = pneg %p106
      %p113 = scmp.eq.s32.totalorder %s10, 1
      %p114 = por %p112, %p113
      %p115 = scmp.ne.s32.totalorder %s107, %s110
      %p116 = scmp.eq.s32.totalorder %s10, 0
      %p117 = por %p115, %p116
      %p118 = scmp.ne.s32.totalorder %s107, %s110
      %p119 = scmp.eq.s32.totalorder %s15, 1
      %p120 = por %p118, %p119
      %p121 = scmp.ne.s32.totalorder %s110, %s111
      %p122 = scmp.eq.s32.totalorder %s15, 0
      %p123 = por %p121, %p122
      %p124 = scmp.ne.s32.totalorder %s110, %s111
      %p125 = scmp.eq.s32.totalorder %s16, 1
      %p126 = por %p124, %p125
      %p128 = scmp.ne.s32.totalorder %s111, %s127
      %p129 = scmp.eq.s32.totalorder %s16, 0
      %p130 = por %p128, %p129
      %p131 = scmp.le.s32.totalorder 1, %s10
      %p132 = scmp.lt.s32.totalorder %s10, 3
      %p133 = pnand %p131, %p132
      %p134 = pneg %p133
      // Predicated region
      $region9: #{logistic_regression_forward.1} parent=5 // pred_check
        _
      $region10: #{logistic_regression_forward.1} parent=5 // pred_check_branch
        %136 = sbr.rel (%p133) target = $region12
      $region11: #{logistic_regression_forward.1} parent=5 // pred_region
        %s137 = ssub.s32 %s10, 1
        // Predicated region
        $region13: #{logistic_regression_forward.1} parent=11 // pred_check
          %p138 = pneg %p97
        $region14: #{logistic_regression_forward.1} parent=11 // pred_check_branch
          %140 = sbr.rel (%p138) target = $region16
        $region15: #{logistic_regression_forward.1} parent=11 // pred_region
          _
        $region16: #{logistic_regression_forward.1} parent=11 // pred_fallthru
          _
      $region12: #{logistic_regression_forward.1} parent=5 // pred_fallthru
        _
      %p141 = scmp.lt.s32.totalorder %s10, 2
      // Predicated region
      $region17: #{logistic_regression_forward.1} parent=5 // pred_check
        %p142 = pneg %p141
      $region18: #{logistic_regression_forward.1} parent=5 // pred_check_branch
        %144 = sbr.rel (%p142) target = $region20
      $region19: #{logistic_regression_forward.1} parent=5 // pred_region
        // Predicated region
        $region21: #{logistic_regression_forward.1} parent=19 // pred_check
          %p145 = pneg %p44
        $region22: #{logistic_regression_forward.1} parent=19 // pred_check_branch
          %147 = sbr.rel (%p145) target = $region24
        $region23: #{logistic_regression_forward.1} parent=19 // pred_region
          %s148 = smul.u32 4, %s18
          %p149 = scmp.lt.s32.totalorder %s17, 0
          %s150 = scalar_select %p149, %s17, 0
          %p151 = scmp.lt.s32.totalorder %s148, 7
          %s152 = scalar_select %p151, %s148, 7
          %s153 = smul.addr %s150, 8
          %s154 = sadd.s32 %s152, %s153
          %s155 = smul.addr %s154, 2
          %s156 = scalar_lea.vmem %s0, %s155
          %s157 = smul.u32 4, %s18
        $region24: #{logistic_regression_forward.1} parent=19 // pred_fallthru
          _
        // Predicated region
        $region25: #{logistic_regression_forward.1} parent=19 // pred_check
          %p158 = pneg %p70
        $region26: #{logistic_regression_forward.1} parent=19 // pred_check_branch
          %160 = sbr.rel (%p158) target = $region28
        $region27: #{logistic_regression_forward.1} parent=19 // pred_region
          %s161 = sand.u32 %s60, 1
          %s162 = sand.u32 %s60, 1
          %s163 = smul.addr %s162, 64
          %s164 = scalar_lea.vmem [#allocation2], %s163
          %s165 = smul.u32 4, %s18
          %s166 = smul.addr %s165, 8
          %s167 = scalar_lea.vmem %s1, %s166
          // Predicated region
          $region29: #{logistic_regression_forward.1} parent=27 // pred_check
            _
          $region30: #{logistic_regression_forward.1} parent=27 // pred_check_branch
            %169 = sbr.rel (0) target = $region32
          $region31: #{logistic_regression_forward.1} parent=27 // pred_region
            // Predicated region
            $region33: #{logistic_regression_forward.1} parent=31 // pred_check
              _
            $region34: #{logistic_regression_forward.1} parent=31 // pred_check_branch
              %171 = sbr.rel (0) target = $region36
            $region35: #{logistic_regression_forward.1} parent=31 // pred_region
              loop: start=0, step=1, limit=1
              $region37: #{logistic_regression_forward.1} parent=35 // loop_pre_header
                _
              $region38: #{logistic_regression_forward.1} parent=35 // loop_header
                %s173 = sphi 0, %s177
                %p174 = scmp.ge.s32.totalorder %s173, 1
                %s178 = sphi %s167, %s167
                %s179 = sphi %s164, %s164
              $region39: #{logistic_regression_forward.1} parent=35 // loop_header_branch
                %176 = sbr.rel (%p174) target = $region43
              $region40: #{logistic_regression_forward.1} parent=35 // loop_body
                %v180 = vld [vmem:[%s178] sm:$0xff]
                %181 = vst [vmem:[%s179] sm:$0xff] %v180
                %v182 = vld [vmem:[%s178 + $0x8] sm:$0xff]
                %183 = vst [vmem:[%s179 + $0x8] sm:$0xff] %v182
                %v184 = vld [vmem:[%s178 + $0x10] sm:$0xff]
                %185 = vst [vmem:[%s179 + $0x10] sm:$0xff] %v184
                %v186 = vld [vmem:[%s178 + $0x18] sm:$0xff]
                %187 = vst [vmem:[%s179 + $0x18] sm:$0xff] %v186
                %v188 = vld [vmem:[%s178 + $0x40] sm:$0xff]
                %189 = vst [vmem:[%s179 + $0x20] sm:$0xff] %v188
                %v190 = vld [vmem:[%s178 + $0x48] sm:$0xff]
                %191 = vst [vmem:[%s179 + $0x28] sm:$0xff] %v190
                %v192 = vld [vmem:[%s178 + $0x50] sm:$0xff]
                %193 = vst [vmem:[%s179 + $0x30] sm:$0xff] %v192
                %v194 = vld [vmem:[%s178 + $0x58] sm:$0xff]
                %195 = vst [vmem:[%s179 + $0x38] sm:$0xff] %v194
              $region41: #{logistic_regression_forward.1} parent=35 // loop_footer
                %s177 = sadd.s32 1, %s173
              $region42: #{logistic_regression_forward.1} parent=35 // loop_footer_branch
                %172 = sbr.rel target = $region38
              $region43: #{logistic_regression_forward.1} parent=35 // loop_exit
                _
            $region36: #{logistic_regression_forward.1} parent=31 // pred_fallthru
              _
            // Predicated region
            $region44: #{logistic_regression_forward.1} parent=31 // pred_check
              _
            $region45: #{logistic_regression_forward.1} parent=31 // pred_check_branch
              %197 = sbr.rel target = $region47
            $region46: #{logistic_regression_forward.1} parent=31 // pred_region
              _
            $region47: #{logistic_regression_forward.1} parent=31 // pred_fallthru
              _
          $region32: #{logistic_regression_forward.1} parent=27 // pred_fallthru
            _
          %198 = vnop
        $region28: #{logistic_regression_forward.1} parent=19 // pred_fallthru
          _
      $region20: #{logistic_regression_forward.1} parent=5 // pred_fallthru
        _
      %p199 = scmp.le.s32.totalorder 1, %s10
      %p200 = scmp.lt.s32.totalorder %s10, 3
      %p201 = pnand %p199, %p200
      %p202 = pneg %p201
      // Predicated region
      $region48: #{logistic_regression_forward.1} parent=5 // pred_check
        _
      $region49: #{logistic_regression_forward.1} parent=5 // pred_check_branch
        %204 = sbr.rel (%p201) target = $region51
      $region50: #{logistic_regression_forward.1} parent=5 // pred_region
        %s205 = ssub.s32 %s10, 1
        %s206 = sand.u32 %s63, 1
        %s207 = sand.u32 %s63, 1
        %s208 = smul.addr %s207, 64
        %s209 = scalar_lea.vmem [#allocation2], %s208
        // Predicated region
        $region52: #{logistic_regression_forward.1} parent=50 // pred_check
          %p210 = pneg %p76
        $region53: #{logistic_regression_forward.1} parent=50 // pred_check_branch
          %212 = sbr.rel (%p210) target = $region55
        $region54: #{logistic_regression_forward.1} parent=50 // pred_region
          _
        $region55: #{logistic_regression_forward.1} parent=50 // pred_fallthru
          _
        %s213 = smul.u32 4, %s20
        %p214 = scmp.lt.s32.totalorder %s19, 0
        %s215 = scalar_select %p214, %s19, 0
        %p216 = scmp.lt.s32.totalorder %s213, 7
        %s217 = scalar_select %p216, %s213, 7
        %s218 = smul.addr %s215, 8
        %s219 = sadd.s32 %s217, %s218
        %s220 = smul.addr %s219, 2
        %s221 = scalar_lea.vmem %s0, %s220
        %p222 = pneg %p50
        %p223 = pneg %p47
        %s224 = sand.u32 %s63, 1
        %s225 = sand.u32 %s63, 1
        %s226 = smul.addr %s225, 64
        %s227 = scalar_lea.vmem [#allocation2], %s226
        %p228 = pneg %p76
        %p229 = pneg %p73
        %p230 = pneg %p97
        %p231 = pneg %p94
        %p232 = pneg %p123
        %p233 = pneg %p120
        %s234 = smul.u32 4, %s20
        %p235 = scmp.lt.s32.totalorder %s19, 0
        %s236 = scalar_select %p235, %s19, 0
        %p237 = scmp.lt.s32.totalorder %s234, 7
        %s238 = scalar_select %p237, %s234, 7
        %s239 = smul.addr %s236, 8
        %s240 = sadd.s32 %s238, %s239
        %s241 = smul.addr %s240, 2
        %s242 = scalar_lea.vmem %s0, %s241
        %s243 = smul.u32 4, %s20
        %s244 = smul.u32 4, %s20
        %p245 = scmp.eq.s32.totalorder %s20, 0
        // Predicated region
        $region56: #{logistic_regression_forward.1} parent=50 // pred_check
          %p246 = pneg %p245
        $region57: #{logistic_regression_forward.1} parent=50 // pred_check_branch
          %248 = sbr.rel (%p246) target = $region59
        $region58: #{logistic_regression_forward.1} parent=50 // pred_region
          %v249 = vld [vmem:[%s2] sm:$0x1]
          %v251 = vlaneseq
          %v252 = vshrl.u32 %v251, 7
          %v253 = vsub.s32 0, %v252
          %v254 = vrot.slane %v249, %v253
          %vm256 = vcmask 74752
          %257 = vst.msk [vmem:[#allocation3] sm:$0x3] %vm256, %v254
        $region59: #{logistic_regression_forward.1} parent=50 // pred_fallthru
          _
        %v258 = vld [vmem:[#allocation3] sm:$0x3]
        %v259 = vld [vmem:[%s242] sm:$0xff]
        %v260 = vld [vmem:[%s209] sm:$0xff]
        %v261 = vld [vmem:[%s209 + $0x8] sm:$0xff]
        %v262 = vld [vmem:[%s209 + $0x10] sm:$0xff]
        %v263 = vld [vmem:[%s209 + $0x18] sm:$0xff]
        %v264 = vld [vmem:[%s209 + $0x20] sm:$0x3]
        %v265 = vld [vmem:[%s209 + $0x28] sm:$0x3]
        %v266 = vld [vmem:[%s209 + $0x30] sm:$0x3]
        %v267 = vld [vmem:[%s209 + $0x38] sm:$0x3]
        %v269 = vcombine.high %v259, %v259
        %v271 = vunpack.c.l.s4 1983009808
        %v272 = vunpack.c.0.s8 %v271
        %v273 = vlaneseq
        %v274 = vshrl.u32 %v273, 7
        %v275 = vsub.s32 %v272, %v274
        %v276 = vrot.slane %v259, %v275
        %v278 = vunpack.c.l.s4 1983009808
        %v279 = vunpack.c.0.s8 %v278
        %v280 = vlaneseq
        %v281 = vshrl.u32 %v280, 7
        %v282 = vsub.s32 %v279, %v281
        %v283 = vrot.slane %v269, %v282
        %v284 = vcombine.high %v276, %v276
        %v285 = vcombine.high %v283, %v283
        %290 = vmatprep.subr.mxu0 0.0
        %291 = vmatpush1.xpose.msra.mxu0 0.0
        %292 = vmatprep.subr.mxu0 0.0
        %293 = vmatpush1.xpose.msra.mxu0 0.0
        %294 = vmatprep.subr.mxu0 0.0
        %295 = vmatpush1.xpose.msra.mxu0 0.0
        %296 = vmatprep.subr.mxu0 0.0
        %297 = vmatpush1.xpose.msra.mxu0 0.0
        %298 = vmatprep.subr.mxu0 0.0
        %299 = vmatpush1.xpose.msra.mxu0 0.0
        %300 = vmatprep.subr.mxu0 0.0
        %301 = vmatpush1.xpose.msra.mxu0 0.0
        %302 = vmatprep.subr.mxu0 0.0
        %303 = vmatpush1.xpose.msra.mxu0 0.0
        %304 = vmatprep.subr.mxu0 0.0
        %305 = vmatpush1.xpose.msra.mxu0 0.0
        %306 = vmatprep.subr.mxu0 0.0
        %307 = vmatpush1.xpose.msra.mxu0 0.0
        %308 = vmatprep.subr.mxu0 0.0
        %309 = vmatpush1.xpose.msra.mxu0 0.0
        %310 = vmatprep.subr.mxu0 0.0
        %311 = vmatpush1.xpose.msra.mxu0 0.0
        %312 = vmatprep.subr.mxu0 0.0
        %313 = vmatpush1.xpose.msra.mxu0 0.0
        %314 = vmatprep.subr.mxu0 0.0
        %315 = vmatpush1.xpose.msra.mxu0 0.0
        %316 = vmatprep.subr.mxu0 0.0
        %317 = vmatpush1.xpose.msra.mxu0 0.0
        %318 = vmatprep.subr.mxu0 %v265
        %319 = vmatpush1.xpose.msra.mxu0 %v264
        %320 = vmatprep.subr.mxu0 %v261
        %321 = vmatpush1.xpose.msra.mxu0 %v260
        %322 = vmatprep.subr.mxu0 0.0
        %323 = vmatpush2.xpose.msra.mxu0 0.0
        %324 = vmatprep.subr.mxu0 0.0
        %325 = vmatpush2.xpose.msra.mxu0 0.0
        %326 = vmatprep.subr.mxu0 0.0
        %327 = vmatpush2.xpose.msra.mxu0 0.0
        %328 = vmatprep.subr.mxu0 0.0
        %329 = vmatpush2.xpose.msra.mxu0 0.0
        %330 = vmatprep.subr.mxu0 0.0
        %331 = vmatpush2.xpose.msra.mxu0 0.0
        %332 = vmatprep.subr.mxu0 0.0
        %333 = vmatpush2.xpose.msra.mxu0 0.0
        %334 = vmatprep.subr.mxu0 0.0
        %335 = vmatpush2.xpose.msra.mxu0 0.0
        %336 = vmatprep.subr.mxu0 0.0
        %337 = vmatpush2.xpose.msra.mxu0 0.0
        %338 = vmatprep.subr.mxu0 0.0
        %339 = vmatpush2.xpose.msra.mxu0 0.0
        %340 = vmatprep.subr.mxu0 0.0
        %341 = vmatpush2.xpose.msra.mxu0 0.0
        %342 = vmatprep.subr.mxu0 0.0
        %343 = vmatpush2.xpose.msra.mxu0 0.0
        %344 = vmatprep.subr.mxu0 0.0
        %345 = vmatpush2.xpose.msra.mxu0 0.0
        %346 = vmatprep.subr.mxu0 0.0
        %347 = vmatpush2.xpose.msra.mxu0 0.0
        %348 = vmatprep.subr.mxu0 0.0
        %349 = vmatpush2.xpose.msra.mxu0 0.0
        %350 = vmatprep.subr.mxu0 0.0
        %351 = vmatpush2.xpose.msra.mxu0 0.0
        %352 = vmatprep.subr.mxu0 0.0
        %353 = vmatpush2.xpose.msra.mxu0 0.0
        %354 = vmatprep.mubr.f32.mxu0 %v284
        %355 = vmatmul.mubr.f32.gmra.mxu0 %v276
        %v356 = vpop.f32.mrf.mxu0
        %v357 = vadd.f32 0.0, %v356
        %v358 = vpop.f32.mrf.mxu0
        %359 = vdwg.mxu0
        %360 = vmatprep.subr.mxu0 0.0
        %361 = vmatpush1.xpose.msra.mxu0 0.0
        %362 = vmatprep.subr.mxu0 0.0
        %363 = vmatpush1.xpose.msra.mxu0 0.0
        %364 = vmatprep.subr.mxu0 0.0
        %365 = vmatpush1.xpose.msra.mxu0 0.0
        %366 = vmatprep.subr.mxu0 0.0
        %367 = vmatpush1.xpose.msra.mxu0 0.0
        %368 = vmatprep.subr.mxu0 0.0
        %369 = vmatpush1.xpose.msra.mxu0 0.0
        %370 = vmatprep.subr.mxu0 0.0
        %371 = vmatpush1.xpose.msra.mxu0 0.0
        %372 = vmatprep.subr.mxu0 0.0
        %373 = vmatpush1.xpose.msra.mxu0 0.0
        %374 = vmatprep.subr.mxu0 0.0
        %375 = vmatpush1.xpose.msra.mxu0 0.0
        %376 = vmatprep.subr.mxu0 0.0
        %377 = vmatpush1.xpose.msra.mxu0 0.0
        %378 = vmatprep.subr.mxu0 0.0
        %379 = vmatpush1.xpose.msra.mxu0 0.0
        %380 = vmatprep.subr.mxu0 0.0
        %381 = vmatpush1.xpose.msra.mxu0 0.0
        %382 = vmatprep.subr.mxu0 0.0
        %383 = vmatpush1.xpose.msra.mxu0 0.0
        %384 = vmatprep.subr.mxu0 0.0
        %385 = vmatpush1.xpose.msra.mxu0 0.0
        %386 = vmatprep.subr.mxu0 0.0
        %387 = vmatpush1.xpose.msra.mxu0 0.0
        %388 = vmatprep.subr.mxu0 %v267
        %389 = vmatpush1.xpose.msra.mxu0 %v266
        %390 = vmatprep.subr.mxu0 %v263
        %391 = vmatpush1.xpose.msra.mxu0 %v262
        %392 = vmatprep.subr.mxu0 0.0
        %393 = vmatpush2.xpose.msra.mxu0 0.0
        %394 = vmatprep.subr.mxu0 0.0
        %395 = vmatpush2.xpose.msra.mxu0 0.0
        %396 = vmatprep.subr.mxu0 0.0
        %397 = vmatpush2.xpose.msra.mxu0 0.0
        %398 = vmatprep.subr.mxu0 0.0
        %399 = vmatpush2.xpose.msra.mxu0 0.0
        %400 = vmatprep.subr.mxu0 0.0
        %401 = vmatpush2.xpose.msra.mxu0 0.0
        %402 = vmatprep.subr.mxu0 0.0
        %403 = vmatpush2.xpose.msra.mxu0 0.0
        %404 = vmatprep.subr.mxu0 0.0
        %405 = vmatpush2.xpose.msra.mxu0 0.0
        %406 = vmatprep.subr.mxu0 0.0
        %407 = vmatpush2.xpose.msra.mxu0 0.0
        %408 = vmatprep.subr.mxu0 0.0
        %409 = vmatpush2.xpose.msra.mxu0 0.0
        %410 = vmatprep.subr.mxu0 0.0
        %411 = vmatpush2.xpose.msra.mxu0 0.0
        %412 = vmatprep.subr.mxu0 0.0
        %413 = vmatpush2.xpose.msra.mxu0 0.0
        %414 = vmatprep.subr.mxu0 0.0
        %415 = vmatpush2.xpose.msra.mxu0 0.0
        %416 = vmatprep.subr.mxu0 0.0
        %417 = vmatpush2.xpose.msra.mxu0 0.0
        %418 = vmatprep.subr.mxu0 0.0
        %419 = vmatpush2.xpose.msra.mxu0 0.0
        %420 = vmatprep.subr.mxu0 0.0
        %421 = vmatpush2.xpose.msra.mxu0 0.0
        %422 = vmatprep.subr.mxu0 0.0
        %423 = vmatpush2.xpose.msra.mxu0 0.0
        %424 = vmatprep.mubr.f32.mxu0 %v285
        %425 = vmatmul.mubr.f32.gmra.mxu0 %v283
        %v426 = vpop.f32.mrf.mxu0
        %v427 = vadd.f32 %v357, %v426
        %v428 = vpop.f32.mrf.mxu0
        %429 = vdwg.mxu0
        %v430 = vadd.f32 %v258, %v427
        %vm431 = vcmask 74752
        %432 = vst.msk [vmem:[#allocation3] sm:$0x3] %vm431, %v430
        // Predicated region
        $region60: #{logistic_regression_forward.1} parent=50 // pred_check
          %p433 = pneg %p120
        $region61: #{logistic_regression_forward.1} parent=50 // pred_check_branch
          %435 = sbr.rel (%p433) target = $region63
        $region62: #{logistic_regression_forward.1} parent=50 // pred_region
          %s437 = ssub.s32 32, 32
          %438 = vsyncadd [#allocation4], %s437
          %s439 = smul.addr %s19, 32
          %s440 = scalar_lea.hbm %s3, %s439
          %s442 = sshll.u32 [#allocation3], 4
          %s443 = int_to_ptr.vmem [resolvable:$true] %s442
          %445 = dma.vmem_to_hbm [thread:$0]  %s443, 32, %s440, [#allocation4]
        $region63: #{logistic_regression_forward.1} parent=50 // pred_fallthru
          _
        // Predicated region
        $region64: #{logistic_regression_forward.1} parent=50 // pred_check
          %p446 = pneg %p120
        $region65: #{logistic_regression_forward.1} parent=50 // pred_check_branch
          %448 = sbr.rel (%p446) target = $region67
        $region66: #{logistic_regression_forward.1} parent=50 // pred_region
          %449 = dma.done [#allocation4], 32
        $region67: #{logistic_regression_forward.1} parent=50 // pred_fallthru
          _
      $region51: #{logistic_regression_forward.1} parent=5 // pred_fallthru
        _
      %p450 = scmp.le.s32.totalorder 2, %s10
      // Predicated region
      $region68: #{logistic_regression_forward.1} parent=5 // pred_check
        %p451 = pneg %p450
      $region69: #{logistic_regression_forward.1} parent=5 // pred_check_branch
        %453 = sbr.rel (%p451) target = $region71
      $region70: #{logistic_regression_forward.1} parent=5 // pred_region
        %s454 = ssub.s32 %s10, 2
      $region71: #{logistic_regression_forward.1} parent=5 // pred_fallthru
        _
    $region6: #{logistic_regression_forward.1} parent=1 // loop_footer
      %s14 = sadd.s32 1, %s10
    $region7: #{logistic_regression_forward.1} parent=1 // loop_footer_branch
      %9 = sbr.rel target = $region3
    $region8: #{logistic_regression_forward.1} parent=1 // loop_exit
      _
    %455 = vsyncpa [#allocation4], 1
    %s456 = scalar_lea.sflag [#allocation4], 1
    %457 = vsyncpa %s456, 1

</llo_original>
